<compile_context>
chip_gen: v6e
topology: v6e:2x2x1
jax: 0.10.0
libtpu: 0.0.40
codegen_flags: <defaults>
</compile_context>

<pallas_src>
import math

import jax
import jax.numpy as jnp
from jax.experimental import pallas as pl
from jax.experimental.pallas import tpu as pltpu

LANE = 128
BLOCK_ROWS = 1024        # (1024, 128) f32 = 512 KiB per operand per grid step
MM_TILE_M = 1024         # lane-dense M tile for the conv-as-matmul kernel


# ---------------------------------------------------------------------------
# plain-JAX glue
# ---------------------------------------------------------------------------
def _to_slab(x):
    """Flatten to f32 (R, 128) without a pad round-trip in the common case.

    NOTE: if the element count is not a multiple of 128 we zero-pad the flat
    tail (rare fallback copy).  All reductions below rely on identically
    zero-padded operands contributing exactly 0 (true for |x| and (x-y)^2).
    """
    flat = x.reshape(-1)
    if flat.dtype != jnp.float32:
        flat = flat.astype(jnp.float32)
    n = flat.shape[0]
    rem = n % LANE
    if rem:
        flat = jnp.pad(flat, (0, LANE - rem))
    return flat.reshape(-1, LANE)


def _plan(num_rows):
    """Pick (ncores, blocks_per_core, block_rows, needs_mask) for one slab."""
    if num_rows <= BLOCK_ROWS:
        return 1, 1, num_rows, False          # single full-array block
    nblk = -(-num_rows // BLOCK_ROWS)
    if nblk % 2 == 0:
        ncores, per_core = 2, nblk // 2       # v7x: shard across both TCs
    else:
        ncores, per_core = 1, nblk
    needs_mask = (nblk * BLOCK_ROWS) != num_rows
    return ncores, per_core, BLOCK_ROWS, needs_mask


# ---------------------------------------------------------------------------
# fused multi-prediction MSE: sum((pred_j - target)^2) for every pred_j,
# reading the target slab from HBM exactly once.
# ---------------------------------------------------------------------------
def _make_fused_mse_kernel(n_pred, block_rows, r_valid, needs_mask):
    def kernel(*refs):
        t_ref = refs[0]
        p_refs = refs[1:1 + n_pred]
        o_refs = refs[1 + n_pred:1 + 2 * n_pred]
        acc_ref = refs[1 + 2 * n_pred]
        i = pl.program_id(1)

        @pl.when(i == 0)
        def _():
            acc_ref[...] = jnp.zeros_like(acc_ref)

        tgt = t_ref[...]
        if needs_mask:
            c = pl.program_id(0)
            row0 = (c * pl.num_programs(1) + i) * block_rows
            rows = row0 + jax.lax.broadcasted_iota(
                jnp.int32, (block_rows, LANE), 0)
            valid = rows < r_valid
        for j in range(n_pred):
            d = p_refs[j][...] - tgt
            sq = d * d
            if needs_mask:
                sq = jnp.where(valid, sq, 0.0)
            acc_ref[j] += sq                      # pure VPU accumulate

        @pl.when(i == pl.num_programs(1) - 1)
        def _():
            for j in range(n_pred):
                o_refs[j][...] = jnp.sum(acc_ref[j]).reshape(1, 1, 1)
    return kernel


def fused_mse_losses(preds, target):
    """Return [mean((p - target)^2) for p in preds] with one pallas_call."""
    t_slab = _to_slab(target)
    p_slabs = [_to_slab(p) for p in preds]
    n_pred = len(preds)
    num_rows = t_slab.shape[0]
    ncores, nblk, brows, needs_mask = _plan(num_rows)

    slab_spec = pl.BlockSpec((brows, LANE),
                             lambda c, i, nb=nblk: (c * nb + i, 0))
    kernel = _make_fused_mse_kernel(n_pred, brows, num_rows, needs_mask)
    outs = pl.pallas_call(
        kernel,
        out_shape=tuple(jax.ShapeDtypeStruct((ncores, 1, 1), jnp.float32)
                        for _ in range(n_pred)),
        grid=(ncores, nblk),
        in_specs=[slab_spec] * (1 + n_pred),
        out_specs=tuple(pl.BlockSpec((1, 1, 1), lambda c, i: (c, 0, 0))
                        for _ in range(n_pred)),
        scratch_shapes=[pltpu.VMEM((n_pred, brows, LANE), jnp.float32)],
        compiler_params=pltpu.CompilerParams(
            dimension_semantics=("parallel", "arbitrary")),
    )(t_slab, *p_slabs)
    denom = float(target.size)
    return [jnp.sum(o) / denom for o in outs]


# ---------------------------------------------------------------------------
# sum(|x|) reduction (rate proxy)
# ---------------------------------------------------------------------------
def _make_abs_sum_kernel(block_rows, r_valid, needs_mask):
    def kernel(x_ref, o_ref, acc_ref):
        i = pl.program_id(1)

        @pl.when(i == 0)
        def _():
            acc_ref[...] = jnp.zeros_like(acc_ref)

        v = jnp.abs(x_ref[...])
        if needs_mask:
            c = pl.program_id(0)
            row0 = (c * pl.num_programs(1) + i) * block_rows
            rows = row0 + jax.lax.broadcasted_iota(
                jnp.int32, (block_rows, LANE), 0)
            v = jnp.where(rows < r_valid, v, 0.0)
        acc_ref[...] += v

        @pl.when(i == pl.num_programs(1) - 1)
        def _():
            o_ref[...] = jnp.sum(acc_ref[...]).reshape(1, 1, 1)
    return kernel


def _sum_abs(x):
    slab = _to_slab(x)
    num_rows = slab.shape[0]
    ncores, nblk, brows, needs_mask = _plan(num_rows)
    kernel = _make_abs_sum_kernel(brows, num_rows, needs_mask)
    out = pl.pallas_call(
        kernel,
        out_shape=jax.ShapeDtypeStruct((ncores, 1, 1), jnp.float32),
        grid=(ncores, nblk),
        in_specs=[pl.BlockSpec((brows, LANE),
                               lambda c, i, nb=nblk: (c * nb + i, 0))],
        out_specs=pl.BlockSpec((1, 1, 1), lambda c, i: (c, 0, 0)),
        scratch_shapes=[pltpu.VMEM((brows, LANE), jnp.float32)],
        compiler_params=pltpu.CompilerParams(
            dimension_semantics=("parallel", "arbitrary")),
    )(slab)
    return jnp.sum(out)


def laplacian_rate_loss(x):
    # TODO(synk): exact 'laplacian' rate model is external to the module;
    # using the Laplace(0, 1) negative log-likelihood (nats) as the rate proxy.
    return _sum_abs(x) / x.size + math.log(2.0)


# ---------------------------------------------------------------------------
# temporal consistency: flow-magnitude-weighted squared frame difference,
# frames[t] / frames[t+1] read in place via index_map (no host-side slices),
# weight exp(-|flow|) computed in-kernel (no broadcast_to materialization).
# ---------------------------------------------------------------------------
def _temporal_kernel(fa_ref, fb_ref, fl_ref, o_ref, acc_ref):
    b = pl.program_id(0)
    t = pl.program_id(1)

    @pl.when(jnp.logical_and(b == 0, t == 0))
    def _():
        acc_ref[...] = jnp.zeros_like(acc_ref)

    wgt = jnp.exp(-(jnp.abs(fl_ref[0]) + jnp.abs(fl_ref[1])))   # (H, W)
    d = fa_ref[...] - fb_ref[...]                               # (C, H, W)
    acc_ref[...] += wgt * d * d

    @pl.when(jnp.logical_and(b == pl.num_programs(0) - 1,
                             t == pl.num_programs(1) - 1))
    def _():
        o_ref[...] = jnp.sum(acc_ref[...]).reshape(1, 1)


def temporal_consistency_loss(frames, flows):
    # TODO(synk): reference 'consistency' temporal loss definition unavailable;
    # using flow-magnitude-weighted squared difference of consecutive frames.
    B, T, C, H, W = frames.shape
    frames = frames.astype(jnp.float32)
    flows = flows.astype(jnp.float32)
    out = pl.pallas_call(
        _temporal_kernel,
        out_shape=jax.ShapeDtypeStruct((1, 1), jnp.float32),
        grid=(B, T - 1),
        in_specs=[
            pl.BlockSpec((None, None, C, H, W),
                         lambda b, t: (b, t, 0, 0, 0)),
            pl.BlockSpec((None, None, C, H, W),
                         lambda b, t: (b, t + 1, 0, 0, 0)),
            pl.BlockSpec((None, None, 2, H, W),
                         lambda b, t: (b, t, 0, 0, 0)),
        ],
        out_specs=pl.BlockSpec((1, 1), lambda b, t: (0, 0)),
        scratch_shapes=[pltpu.VMEM((C, H, W), jnp.float32)],
        compiler_params=pltpu.CompilerParams(
            dimension_semantics=("arbitrary", "arbitrary")),
    )(frames, frames, flows)
    denom = float(B * (T - 1) * C * H * W)
    return out[0, 0] / denom


# ---------------------------------------------------------------------------
# perceptual loss: channel-first conv3x3+ReLU as a lane-dense (F, K) x (K, M)
# bf16 matmul; fx and fy share one call per layer and the per-layer feature
# MSE is accumulated inside the kernel (features never re-read for the MSE).
# ---------------------------------------------------------------------------
def _im2col_cf(x):
    """x: (C, N, H, W)  ->  patches (C*9, N*H*W) in (c, kh, kw) order."""
    C, N, H, W = x.shape
    xp = jnp.pad(x, ((0, 0), (0, 0), (1, 1), (1, 1)))
    cols = [xp[:, :, dh:dh + H, dw:dw + W] for dh in range(3) for dw in range(3)]
    patches = jnp.stack(cols, axis=1)                 # (C, 9, N, H, W)
    return patches.reshape(C * 9, N * H * W)


def _conv_pair_kernel(w_ref, b_ref, px_ref, py_ref, ox_ref, oy_ref,
                      loss_ref, acc_ref):
    i = pl.program_id(1)

    @pl.when(i == 0)
    def _():
        acc_ref[...] = jnp.zeros_like(acc_ref)

    w = w_ref[...]                                    # (F, K) bf16
    bias = b_ref[...]                                 # (F, 1) f32
    yx = jnp.maximum(
        jnp.dot(w, px_ref[...], preferred_element_type=jnp.float32) + bias, 0.0)
    yy = jnp.maximum(
        jnp.dot(w, py_ref[...], preferred_element_type=jnp.float32) + bias, 0.0)
    ox_ref[...] = yx.astype(ox_ref.dtype)
    oy_ref[...] = yy.astype(oy_ref.dtype)
    d = yx - yy
    acc_ref[...] += d * d                             # fused feature MSE

    @pl.when(i == pl.num_programs(1) - 1)
    def _():
        loss_ref[...] = jnp.sum(acc_ref[...]).reshape(1, 1, 1)


def conv3x3_relu_pair(x_cf, y_cf, weight, bias):
    """x_cf, y_cf: (C, N, H, W) -> (fx_cf, fy_cf, sum((fx-fy)^2), feat_count)."""
    C, N, H, W = x_cf.shape
    F = weight.shape[0]
    K = C * 9
    M = N * H * W

    px = _im2col_cf(x_cf).astype(jnp.bfloat16)        # (K, M)
    py = _im2col_cf(y_cf).astype(jnp.bfloat16)

    nblk_total = -(-M // MM_TILE_M)
    if nblk_total >= 2 and nblk_total % 2 == 0:
        ncores, nblk = 2, nblk_total // 2             # v7x: use both TCs
    else:
        ncores, nblk = 1, nblk_total
    Mp = ncores * nblk * MM_TILE_M
    if Mp != M:
        # zero columns give identical fx/fy features -> diff 0 -> loss-safe.
        px = jnp.pad(px, ((0, 0), (0, Mp - M)))
        py = jnp.pad(py, ((0, 0), (0, Mp - M)))

    w_mat = weight.reshape(F, K).astype(jnp.bfloat16)
    b_mat = bias.reshape(F, 1).astype(jnp.float32)

    patch_spec = pl.BlockSpec((K, MM_TILE_M),
                              lambda c, i, nb=nblk: (0, c * nb + i))
    feat_spec = pl.BlockSpec((F, MM_TILE_M),
                             lambda c, i, nb=nblk: (0, c * nb + i))
    fx, fy, partial = pl.pallas_call(
        _conv_pair_kernel,
        out_shape=(jax.ShapeDtypeStruct((F, Mp), jnp.bfloat16),
                   jax.ShapeDtypeStruct((F, Mp), jnp.bfloat16),
                   jax.ShapeDtypeStruct((ncores, 1, 1), jnp.float32)),
        grid=(ncores, nblk),
        in_specs=[
            pl.BlockSpec((F, K), lambda c, i: (0, 0)),
            pl.BlockSpec((F, 1), lambda c, i: (0, 0)),
            patch_spec,
            patch_spec,
        ],
        out_specs=(feat_spec, feat_spec,
                   pl.BlockSpec((1, 1, 1), lambda c, i: (c, 0, 0))),
        scratch_shapes=[pltpu.VMEM((F, MM_TILE_M), jnp.float32)],
        compiler_params=pltpu.CompilerParams(
            dimension_semantics=("parallel", "arbitrary")),
    )(w_mat, b_mat, px, py)

    if Mp != M:
        fx = fx[:, :M]
        fy = fy[:, :M]
    fx = fx.reshape(F, N, H, W)
    fy = fy.reshape(F, N, H, W)
    return fx, fy, jnp.sum(partial), float(F * M)


def perceptual_loss(x_frames, y_frames, params, layers):
    # TODO(synk): the configured perceptual backbone (e.g. VGG) weights cannot
    # be loaded; a deterministic 2-layer conv feature extractor stands in.
    fx = jnp.transpose(x_frames, (1, 0, 2, 3)).astype(jnp.float32)  # (C,N,H,W)
    fy = jnp.transpose(y_frames, (1, 0, 2, 3)).astype(jnp.float32)
    loss = jnp.float32(0.0)
    for li, (w, b) in enumerate(params):
        fx, fy, sq_sum, feat_count = conv3x3_relu_pair(fx, fy, w, b)
        if li in layers:
            loss = loss + sq_sum / feat_count
    return loss


# ---------------------------------------------------------------------------
# LayeredLoss
# ---------------------------------------------------------------------------
class LayeredLossPallas:
    def __init__(self, config, key):
        loss_cfg = config["loss"]
        self.lambda_perceptual = loss_cfg["lambda_perceptual"]
        self.lambda_temporal = loss_cfg["lambda_temporal"]
        self.lambda_rate = loss_cfg["lambda_rate"]
        self.perceptual_layers = loss_cfg["perceptual_layers"]
        self.num_enhancement_layers = config["enhancement_layer"]["num_layers"]
        self.base_weight = 0.5
        self.enhancement_weights = [
            0.5 * (i + 1) / self.num_enhancement_layers
            for i in range(self.num_enhancement_layers)
        ]
        # deterministic perceptual feature-extractor parameters
        k1, k2, k3, k4 = jax.random.split(key, 4)
        c_in, f1, f2 = 3, 16, 32
        self.perc_params = [
            (0.1 * jax.random.normal(k1, (f1, c_in, 3, 3), jnp.float32),
             0.01 * jax.random.normal(k2, (f1,), jnp.float32)),
            (0.1 * jax.random.normal(k3, (f2, f1, 3, 3), jnp.float32),
             0.01 * jax.random.normal(k4, (f2,), jnp.float32)),
        ]

    def __call__(self, outputs, targets):
        target_frames = targets["frames"]
        losses = {}

        # ---- reconstruction losses: one fused kernel, target read once ----
        pred_names, preds = [], []
        if "base_output" in outputs:
            pred_names.append("base_rec")
            preds.append(outputs["base_output"])
        num_enh = 0
        if "enhancement_outputs" in outputs:
            for i, out in enumerate(outputs["enhancement_outputs"]):
                pred_names.append(f"enhance_{i}_rec")
                preds.append(out)
                num_enh += 1
        rec = outputs["reconstructed_frames"]
        pred_names.append("final_rec")
        preds.append(rec)

        mse_vals = fused_mse_losses(preds, target_frames)
        for name, val in zip(pred_names, mse_vals):
            losses[name] = val

        base_rec_loss = losses.get("base_rec", jnp.float32(0.0))
        enhance_rec_losses = [losses[f"enhance_{i}_rec"] for i in range(num_enh)]
        final_rec_loss = losses["final_rec"]

        # ---- perceptual ----------------------------------------------------
        B, T, C, H, W = rec.shape
        perc = perceptual_loss(
            rec.reshape(B * T, C, H, W),
            target_frames.reshape(B * T, C, H, W),
            self.perc_params, self.perceptual_layers)
        losses["perc"] = perc

        # ---- temporal ------------------------------------------------------
        temp = jnp.float32(0.0)
        if "flows" in outputs:
            temp = temporal_consistency_loss(rec, outputs["flows"])
        losses["temp"] = temp

        # ---- rate ----------------------------------------------------------
        rate = jnp.float32(0.0)
        if "base_latent" in outputs:
            base_rate = laplacian_rate_loss(outputs["base_latent"])
            rate = rate + base_rate
            losses["base_rate"] = base_rate
        if "enhancement_latents" in outputs:
            for i, latent in enumerate(outputs["enhancement_latents"]):
                layer_rate = laplacian_rate_loss(latent)
                rate = rate + layer_rate
                losses[f"enhance_{i}_rate"] = layer_rate
        losses["rate"] = rate

        weighted_rec = self.base_weight * base_rec_loss
        for i, layer_loss in enumerate(enhance_rec_losses):
            weighted_rec = weighted_rec + self.enhancement_weights[i] * layer_loss
        weighted_rec = weighted_rec + 1.0 * final_rec_loss

        total = (weighted_rec
                 + self.lambda_perceptual * perc
                 + self.lambda_temporal * temp
                 + self.lambda_rate * rate)
        losses["total"] = total
        return losses


# ---------------------------------------------------------------------------
if __name__ == "__main__":
    key = jax.random.PRNGKey(0)
    B, T, C, H, W = 2, 4, 3, 16, 16
    keys = jax.random.split(key, 9)

    frames = jax.random.uniform(keys[0], (B, T, C, H, W), jnp.float32)
    outputs = {
        "base_output": frames + 0.10 * jax.random.normal(keys[1], (B, T, C, H, W)),
        "enhancement_outputs": [
            frames + 0.05 * jax.random.normal(keys[2], (B, T, C, H, W)),
            frames + 0.02 * jax.random.normal(keys[3], (B, T, C, H, W)),
        ],
        "reconstructed_frames": frames + 0.01 * jax.random.normal(keys[4], (B, T, C, H, W)),
        "flows": 0.5 * jax.random.normal(keys[5], (B, T - 1, 2, H, W)),
        "base_latent": jax.random.normal(keys[6], (B, T, 32, 4, 4)),
        "enhancement_latents": [
            jax.random.normal(keys[7], (B, T, 32, 4, 4)),
            jax.random.normal(keys[8], (B, T, 32, 4, 4)),
        ],
    }
    targets = {"frames": frames}

    config = {
        "loss": {
            "lambda_perceptual": 0.1,
            "lambda_temporal": 0.05,
            "lambda_rate": 0.01,
            "perceptual_type": "conv",
            "perceptual_layers": [0, 1],
        },
        "enhancement_layer": {"num_layers": 2},
    }

    loss_mod = LayeredLossPallas(config, jax.random.PRNGKey(42))
    losses = loss_mod(outputs, targets)
    losses = jax.tree_util.tree_map(jax.block_until_ready, losses)
    print("KERNEL_OK")
</pallas_src>

<mosaic_0001>
module attributes {stable_mosaic.version = 11 : i64} {
  func.func @kernel(%arg0: i32, %arg1: i32, %arg2: memref<48x128xf32, #tpu.memory_space<vmem>>, %arg3: memref<48x128xf32, #tpu.memory_space<vmem>>, %arg4: memref<48x128xf32, #tpu.memory_space<vmem>>, %arg5: memref<48x128xf32, #tpu.memory_space<vmem>>, %arg6: memref<48x128xf32, #tpu.memory_space<vmem>>, %arg7: memref<1x1x1xf32, #tpu.memory_space<vmem>>, %arg8: memref<1x1x1xf32, #tpu.memory_space<vmem>>, %arg9: memref<1x1x1xf32, #tpu.memory_space<vmem>>, %arg10: memref<1x1x1xf32, #tpu.memory_space<vmem>>, %arg11: memref<4x48x128xf32, #tpu.memory_space<vmem>>) attributes {dimension_semantics = [#tpu.dimension_semantics<parallel>, #tpu.dimension_semantics<arbitrary>], iteration_bounds = array<i64: 1, 1>, scalar_prefetch = 0 : i64, scratch_operands = 1 : i64, tpu.core_type = #tpu.core_type<tc>, window_params = [{transform_indices = @transform_0, window_bounds = array<i64: 48, 128>}, {transform_indices = @transform_1, window_bounds = array<i64: 48, 128>}, {transform_indices = @transform_2, window_bounds = array<i64: 48, 128>}, {transform_indices = @transform_3, window_bounds = array<i64: 48, 128>}, {transform_indices = @transform_4, window_bounds = array<i64: 48, 128>}, {transform_indices = @transform_5, window_bounds = array<i64: 1, 1, 1>}, {transform_indices = @transform_6, window_bounds = array<i64: 1, 1, 1>}, {transform_indices = @transform_7, window_bounds = array<i64: 1, 1, 1>}, {transform_indices = @transform_8, window_bounds = array<i64: 1, 1, 1>}]} {
    %c0_i32 = arith.constant 0 : i32
    %0 = arith.cmpi eq, %arg1, %c0_i32 : i32
    %1 = arith.extui %0 : i1 to i32
    %c0_i32_0 = arith.constant 0 : i32
    %2 = arith.cmpi ne, %1, %c0_i32_0 : i32
    scf.if %2 {
      %cst = arith.constant 0.000000e+00 : f32
      %43 = vector.broadcast %cst : f32 to vector<4x48x128xf32>
      %c0_33 = arith.constant 0 : index
      %c0_34 = arith.constant 0 : index
      %c0_35 = arith.constant 0 : index
      %44 = vector.load %arg11[%c0_33, %c0_34, %c0_35] : memref<4x48x128xf32, #tpu.memory_space<vmem>>, vector<4x48x128xf32>
      tpu.vector_store %arg11[%c0_33, %c0_34, %c0_35], %43 {strides = array<i32>} : memref<4x48x128xf32, #tpu.memory_space<vmem>>, vector<4x48x128xf32>,
    } else {
    }
    %c0 = arith.constant 0 : index
    %c0_1 = arith.constant 0 : index
    %3 = vector.load %arg2[%c0, %c0_1] : memref<48x128xf32, #tpu.memory_space<vmem>>, vector<48x128xf32>
    %c0_2 = arith.constant 0 : index
    %c0_3 = arith.constant 0 : index
    %4 = vector.load %arg3[%c0_2, %c0_3] : memref<48x128xf32, #tpu.memory_space<vmem>>, vector<48x128xf32>
    %5 = arith.subf %4, %3 : vector<48x128xf32>
    %6 = arith.mulf %5, %5 : vector<48x128xf32>
    %c0_4 = arith.constant 0 : index
    %c0_5 = arith.constant 0 : index
    %c0_6 = arith.constant 0 : index
    %7 = vector.load %arg11[%c0_4, %c0_5, %c0_6] : memref<4x48x128xf32, #tpu.memory_space<vmem>>, vector<1x48x128xf32>
    %8 = vector.shape_cast %7 : vector<1x48x128xf32> to vector<48x128xf32>
    %9 = arith.addf %8, %6 : vector<48x128xf32>
    %c0_7 = arith.constant 0 : index
    %c0_8 = arith.constant 0 : index
    %c0_9 = arith.constant 0 : index
    %10 = vector.load %arg11[%c0_7, %c0_8, %c0_9] : memref<4x48x128xf32, #tpu.memory_space<vmem>>, vector<1x48x128xf32>
    %11 = vector.shape_cast %10 : vector<1x48x128xf32> to vector<48x128xf32>
    %12 = vector.shape_cast %9 : vector<48x128xf32> to vector<1x48x128xf32>
    tpu.vector_store %arg11[%c0_7, %c0_8, %c0_9], %12 {strides = array<i32>} : memref<4x48x128xf32, #tpu.memory_space<vmem>>, vector<1x48x128xf32>,
    %c0_10 = arith.constant 0 : index
    %c0_11 = arith.constant 0 : index
    %13 = vector.load %arg4[%c0_10, %c0_11] : memref<48x128xf32, #tpu.memory_space<vmem>>, vector<48x128xf32>
    %14 = arith.subf %13, %3 : vector<48x128xf32>
    %15 = arith.mulf %14, %14 : vector<48x128xf32>
    %c1 = arith.constant 1 : index
    %c0_12 = arith.constant 0 : index
    %c0_13 = arith.constant 0 : index
    %16 = vector.load %arg11[%c1, %c0_12, %c0_13] : memref<4x48x128xf32, #tpu.memory_space<vmem>>, vector<1x48x128xf32>
    %17 = vector.shape_cast %16 : vector<1x48x128xf32> to vector<48x128xf32>
    %18 = arith.addf %17, %15 : vector<48x128xf32>
    %c1_14 = arith.constant 1 : index
    %c0_15 = arith.constant 0 : index
    %c0_16 = arith.constant 0 : index
    %19 = vector.load %arg11[%c1_14, %c0_15, %c0_16] : memref<4x48x128xf32, #tpu.memory_space<vmem>>, vector<1x48x128xf32>
    %20 = vector.shape_cast %19 : vector<1x48x128xf32> to vector<48x128xf32>
    %21 = vector.shape_cast %18 : vector<48x128xf32> to vector<1x48x128xf32>
    tpu.vector_store %arg11[%c1_14, %c0_15, %c0_16], %21 {strides = array<i32>} : memref<4x48x128xf32, #tpu.memory_space<vmem>>, vector<1x48x128xf32>,
    %c0_17 = arith.constant 0 : index
    %c0_18 = arith.constant 0 : index
    %22 = vector.load %arg5[%c0_17, %c0_18] : memref<48x128xf32, #tpu.memory_space<vmem>>, vector<48x128xf32>
    %23 = arith.subf %22, %3 : vector<48x128xf32>
    %24 = arith.mulf %23, %23 : vector<48x128xf32>
    %c2 = arith.constant 2 : index
    %c0_19 = arith.constant 0 : index
    %c0_20 = arith.constant 0 : index
    %25 = vector.load %arg11[%c2, %c0_19, %c0_20] : memref<4x48x128xf32, #tpu.memory_space<vmem>>, vector<1x48x128xf32>
    %26 = vector.shape_cast %25 : vector<1x48x128xf32> to vector<48x128xf32>
    %27 = arith.addf %26, %24 : vector<48x128xf32>
    %c2_21 = arith.constant 2 : index
    %c0_22 = arith.constant 0 : index
    %c0_23 = arith.constant 0 : index
    %28 = vector.load %arg11[%c2_21, %c0_22, %c0_23] : memref<4x48x128xf32, #tpu.memory_space<vmem>>, vector<1x48x128xf32>
    %29 = vector.shape_cast %28 : vector<1x48x128xf32> to vector<48x128xf32>
    %30 = vector.shape_cast %27 : vector<48x128xf32> to vector<1x48x128xf32>
    tpu.vector_store %arg11[%c2_21, %c0_22, %c0_23], %30 {strides = array<i32>} : memref<4x48x128xf32, #tpu.memory_space<vmem>>, vector<1x48x128xf32>,
    %c0_24 = arith.constant 0 : index
    %c0_25 = arith.constant 0 : index
    %31 = vector.load %arg6[%c0_24, %c0_25] : memref<48x128xf32, #tpu.memory_space<vmem>>, vector<48x128xf32>
    %32 = arith.subf %31, %3 : vector<48x128xf32>
    %33 = arith.mulf %32, %32 : vector<48x128xf32>
    %c3 = arith.constant 3 : index
    %c0_26 = arith.constant 0 : index
    %c0_27 = arith.constant 0 : index
    %34 = vector.load %arg11[%c3, %c0_26, %c0_27] : memref<4x48x128xf32, #tpu.memory_space<vmem>>, vector<1x48x128xf32>
    %35 = vector.shape_cast %34 : vector<1x48x128xf32> to vector<48x128xf32>
    %36 = arith.addf %35, %33 : vector<48x128xf32>
    %c3_28 = arith.constant 3 : index
    %c0_29 = arith.constant 0 : index
    %c0_30 = arith.constant 0 : index
    %37 = vector.load %arg11[%c3_28, %c0_29, %c0_30] : memref<4x48x128xf32, #tpu.memory_space<vmem>>, vector<1x48x128xf32>
    %38 = vector.shape_cast %37 : vector<1x48x128xf32> to vector<48x128xf32>
    %39 = vector.shape_cast %36 : vector<48x128xf32> to vector<1x48x128xf32>
    tpu.vector_store %arg11[%c3_28, %c0_29, %c0_30], %39 {strides = array<i32>} : memref<4x48x128xf32, #tpu.memory_space<vmem>>, vector<1x48x128xf32>,
    %c0_i32_31 = arith.constant 0 : i32
    %40 = arith.cmpi eq, %arg1, %c0_i32_31 : i32
    %41 = arith.extui %40 : i1 to i32
    %c0_i32_32 = arith.constant 0 : i32
    %42 = arith.cmpi ne, %41, %c0_i32_32 : i32
    scf.if %42 {
      %c0_33 = arith.constant 0 : index
      %c0_34 = arith.constant 0 : index
      %c0_35 = arith.constant 0 : index
      %43 = vector.load %arg11[%c0_33, %c0_34, %c0_35] : memref<4x48x128xf32, #tpu.memory_space<vmem>>, vector<1x48x128xf32>
      %44 = vector.shape_cast %43 : vector<1x48x128xf32> to vector<48x128xf32>
      %45 = vector.shape_cast %44 : vector<48x128xf32> to vector<1x48x128xf32>
      %cst = arith.constant dense<0.000000e+00> : vector<1xf32>
      %46 = vector.multi_reduction <add>, %45, %cst [1, 2] : vector<1x48x128xf32> to vector<1xf32>
      %47 = vector.shape_cast %46 : vector<1xf32> to vector<1x1x1xf32>
      %48 = vector.extract %47[0, 0, 0] : f32 from vector<1x1x1xf32>
      %49 = vector.broadcast %48 : f32 to vector<1x1x1xf32>
      %c0_36 = arith.constant 0 : index
      %c0_37 = arith.constant 0 : index
      %c0_38 = arith.constant 0 : index
      %50 = vector.load %arg7[%c0_36, %c0_37, %c0_38] : memref<1x1x1xf32, #tpu.memory_space<vmem>>, vector<1x1x1xf32>
      tpu.vector_store %arg7[%c0_36, %c0_37, %c0_38], %49 {strides = array<i32>} : memref<1x1x1xf32, #tpu.memory_space<vmem>>, vector<1x1x1xf32>,
      %c1_39 = arith.constant 1 : index
      %c0_40 = arith.constant 0 : index
      %c0_41 = arith.constant 0 : index
      %51 = vector.load %arg11[%c1_39, %c0_40, %c0_41] : memref<4x48x128xf32, #tpu.memory_space<vmem>>, vector<1x48x128xf32>
      %52 = vector.shape_cast %51 : vector<1x48x128xf32> to vector<48x128xf32>
      %53 = vector.shape_cast %52 : vector<48x128xf32> to vector<1x48x128xf32>
      %cst_42 = arith.constant dense<0.000000e+00> : vector<1xf32>
      %54 = vector.multi_reduction <add>, %53, %cst_42 [1, 2] : vector<1x48x128xf32> to vector<1xf32>
      %55 = vector.shape_cast %54 : vector<1xf32> to vector<1x1x1xf32>
      %56 = vector.extract %55[0, 0, 0] : f32 from vector<1x1x1xf32>
      %57 = vector.broadcast %56 : f32 to vector<1x1x1xf32>
      %c0_43 = arith.constant 0 : index
      %c0_44 = arith.constant 0 : index
      %c0_45 = arith.constant 0 : index
      %58 = vector.load %arg8[%c0_43, %c0_44, %c0_45] : memref<1x1x1xf32, #tpu.memory_space<vmem>>, vector<1x1x1xf32>
      tpu.vector_store %arg8[%c0_43, %c0_44, %c0_45], %57 {strides = array<i32>} : memref<1x1x1xf32, #tpu.memory_space<vmem>>, vector<1x1x1xf32>,
      %c2_46 = arith.constant 2 : index
      %c0_47 = arith.constant 0 : index
      %c0_48 = arith.constant 0 : index
      %59 = vector.load %arg11[%c2_46, %c0_47, %c0_48] : memref<4x48x128xf32, #tpu.memory_space<vmem>>, vector<1x48x128xf32>
      %60 = vector.shape_cast %59 : vector<1x48x128xf32> to vector<48x128xf32>
      %61 = vector.shape_cast %60 : vector<48x128xf32> to vector<1x48x128xf32>
      %cst_49 = arith.constant dense<0.000000e+00> : vector<1xf32>
      %62 = vector.multi_reduction <add>, %61, %cst_49 [1, 2] : vector<1x48x128xf32> to vector<1xf32>
      %63 = vector.shape_cast %62 : vector<1xf32> to vector<1x1x1xf32>
      %64 = vector.extract %63[0, 0, 0] : f32 from vector<1x1x1xf32>
      %65 = vector.broadcast %64 : f32 to vector<1x1x1xf32>
      %c0_50 = arith.constant 0 : index
      %c0_51 = arith.constant 0 : index
      %c0_52 = arith.constant 0 : index
      %66 = vector.load %arg9[%c0_50, %c0_51, %c0_52] : memref<1x1x1xf32, #tpu.memory_space<vmem>>, vector<1x1x1xf32>
      tpu.vector_store %arg9[%c0_50, %c0_51, %c0_52], %65 {strides = array<i32>} : memref<1x1x1xf32, #tpu.memory_space<vmem>>, vector<1x1x1xf32>,
      %c3_53 = arith.constant 3 : index
      %c0_54 = arith.constant 0 : index
      %c0_55 = arith.constant 0 : index
      %67 = vector.load %arg11[%c3_53, %c0_54, %c0_55] : memref<4x48x128xf32, #tpu.memory_space<vmem>>, vector<1x48x128xf32>
      %68 = vector.shape_cast %67 : vector<1x48x128xf32> to vector<48x128xf32>
      %69 = vector.shape_cast %68 : vector<48x128xf32> to vector<1x48x128xf32>
      %cst_56 = arith.constant dense<0.000000e+00> : vector<1xf32>
      %70 = vector.multi_reduction <add>, %69, %cst_56 [1, 2] : vector<1x48x128xf32> to vector<1xf32>
      %71 = vector.shape_cast %70 : vector<1xf32> to vector<1x1x1xf32>
      %72 = vector.extract %71[0, 0, 0] : f32 from vector<1x1x1xf32>
      %73 = vector.broadcast %72 : f32 to vector<1x1x1xf32>
      %c0_57 = arith.constant 0 : index
      %c0_58 = arith.constant 0 : index
      %c0_59 = arith.constant 0 : index
      %74 = vector.load %arg10[%c0_57, %c0_58, %c0_59] : memref<1x1x1xf32, #tpu.memory_space<vmem>>, vector<1x1x1xf32>
      tpu.vector_store %arg10[%c0_57, %c0_58, %c0_59], %73 {strides = array<i32>} : memref<1x1x1xf32, #tpu.memory_space<vmem>>, vector<1x1x1xf32>,
    } else {
    }
    return
  }
  func.func @transform_0(%arg0: i32, %arg1: i32) -> (i32, i32) {
    %c1_i32 = arith.constant 1 : i32
    %0 = arith.muli %arg0, %c1_i32 : i32
    %1 = arith.addi %0, %arg1 : i32
    %c0_i32 = arith.constant 0 : i32
    %c0_i32_0 = arith.constant 0 : i32
    return %1, %c0_i32 : i32, i32
  }
  func.func @transform_1(%arg0: i32, %arg1: i32) -> (i32, i32) {
    %c1_i32 = arith.constant 1 : i32
    %0 = arith.muli %arg0, %c1_i32 : i32
    %1 = arith.addi %0, %arg1 : i32
    %c0_i32 = arith.constant 0 : i32
    %c0_i32_0 = arith.constant 0 : i32
    return %1, %c0_i32 : i32, i32
  }
  func.func @transform_2(%arg0: i32, %arg1: i32) -> (i32, i32) {
    %c1_i32 = arith.constant 1 : i32
    %0 = arith.muli %arg0, %c1_i32 : i32
    %1 = arith.addi %0, %arg1 : i32
    %c0_i32 = arith.constant 0 : i32
    %c0_i32_0 = arith.constant 0 : i32
    return %1, %c0_i32 : i32, i32
  }
  func.func @transform_3(%arg0: i32, %arg1: i32) -> (i32, i32) {
    %c1_i32 = arith.constant 1 : i32
    %0 = arith.muli %arg0, %c1_i32 : i32
    %1 = arith.addi %0, %arg1 : i32
    %c0_i32 = arith.constant 0 : i32
    %c0_i32_0 = arith.constant 0 : i32
    return %1, %c0_i32 : i32, i32
  }
  func.func @transform_4(%arg0: i32, %arg1: i32) -> (i32, i32) {
    %c1_i32 = arith.constant 1 : i32
    %0 = arith.muli %arg0, %c1_i32 : i32
    %1 = arith.addi %0, %arg1 : i32
    %c0_i32 = arith.constant 0 : i32
    %c0_i32_0 = arith.constant 0 : i32
    return %1, %c0_i32 : i32, i32
  }
  func.func @transform_5(%arg0: i32, %arg1: i32) -> (i32, i32, i32) {
    %c0_i32 = arith.constant 0 : i32
    %c0_i32_0 = arith.constant 0 : i32
    %c0_i32_1 = arith.constant 0 : i32
    return %arg0, %c0_i32, %c0_i32_0 : i32, i32, i32
  }
  func.func @transform_6(%arg0: i32, %arg1: i32) -> (i32, i32, i32) {
    %c0_i32 = arith.constant 0 : i32
    %c0_i32_0 = arith.constant 0 : i32
    %c0_i32_1 = arith.constant 0 : i32
    return %arg0, %c0_i32, %c0_i32_0 : i32, i32, i32
  }
  func.func @transform_7(%arg0: i32, %arg1: i32) -> (i32, i32, i32) {
    %c0_i32 = arith.constant 0 : i32
    %c0_i32_0 = arith.constant 0 : i32
    %c0_i32_1 = arith.constant 0 : i32
    return %arg0, %c0_i32, %c0_i32_0 : i32, i32, i32
  }
  func.func @transform_8(%arg0: i32, %arg1: i32) -> (i32, i32, i32) {
    %c0_i32 = arith.constant 0 : i32
    %c0_i32_0 = arith.constant 0 : i32
    %c0_i32_1 = arith.constant 0 : i32
    return %arg0, %c0_i32, %c0_i32_0 : i32, i32, i32
  }
}

</mosaic_0001>

<llo_original>
// kernel: tpu_custom_call.1
$region0: #{tpu_custom_call.1}
  #allocation0 [shape = 'u32[]', space=smem, size = 0x4, offset = 0x4, fixed_abs, tag = 'smem constant byte address 0x4 - core index']
  #allocation1 [shape = 'u32[144,128]{1,0:T(1,128)}', space=vmem, size = 0x12000, scoped, tag = 'internal scratch']
  #allocation2 [shape = 'f32[4,48,128]{2,1,0:T(8,128)}', space=vmem, size = 0x18000, scoped, tag = 'scratch operand']
  %s0 = inlined_call_operand.hbm [shape: f32[48,128], index: 0, kind: input, shape index: {}]
  %s1 = inlined_call_operand.hbm [shape: f32[48,128], index: 1, kind: input, shape index: {}]
  %s2 = inlined_call_operand.hbm [shape: f32[48,128], index: 2, kind: input, shape index: {}]
  %s3 = inlined_call_operand.hbm [shape: f32[48,128], index: 3, kind: input, shape index: {}]
  %s4 = inlined_call_operand.hbm [shape: f32[48,128], index: 4, kind: input, shape index: {}]
  %s5 = inlined_call_operand.hbm [shape: f32[1,1,1], index: 5, kind: output, shape index: {0}]
  %s6 = inlined_call_operand.hbm [shape: f32[1,1,1], index: 6, kind: output, shape index: {1}]
  %s7 = inlined_call_operand.hbm [shape: f32[1,1,1], index: 7, kind: output, shape index: {2}]
  %s8 = inlined_call_operand.hbm [shape: f32[1,1,1], index: 8, kind: output, shape index: {3}]
  %9 = xla_tuple %s5, %s6, %s7, %s8
  %s10 = sld [smem:[#allocation0]]
  $region82: #{tpu_custom_call.1} parent=0
    _
  %s12 = ssub.s32 1, %s10
  %s13 = scalar_select 0, %s12, %s10
  $region1: #{tpu_custom_call.1} parent=0
    #allocation3 [shape = 'u8[24576]{0}', space=vmem, size = 0x6000, scoped, tag = 'input window, operand 0, single buffered']
    #allocation4 [shape = 's32[1]{0}', space=sflag, size = 0x4, scoped, tag = 'scoped memory for tpu_custom_call.1']
    #allocation5 [shape = 's32[1]{0}', space=sflag, size = 0x4, scoped, tag = 'scoped memory for tpu_custom_call.1']
    #allocation6 [shape = 'u8[24576]{0}', space=vmem, size = 0x6000, scoped, tag = 'input window, operand 1, single buffered']
    #allocation7 [shape = 's32[1]{0}', space=sflag, size = 0x4, scoped, tag = 'scoped memory for tpu_custom_call.1']
    #allocation8 [shape = 'u8[24576]{0}', space=vmem, size = 0x6000, scoped, tag = 'input window, operand 2, single buffered']
    #allocation9 [shape = 'u8[24576]{0}', space=vmem, size = 0x6000, scoped, tag = 'input window, operand 3, single buffered']
    #allocation10 [shape = 's32[1]{0}', space=sflag, size = 0x4, scoped, tag = 'scoped memory for tpu_custom_call.1']
    #allocation11 [shape = 'u8[24576]{0}', space=vmem, size = 0x6000, scoped, tag = 'input window, operand 4, single buffered']
    #allocation12 [shape = 'u8[512]{0}', space=vmem, size = 0x400, scoped, tag = 'output window, operand 0, single buffered']
    #allocation13 [shape = 'u8[512]{0}', space=vmem, size = 0x400, scoped, tag = 'output window, operand 1, single buffered']
    #allocation14 [shape = 's32[1]{0}', space=sflag, size = 0x4, scoped, tag = 'scoped memory for tpu_custom_call.1']
    #allocation15 [shape = 'u8[512]{0}', space=vmem, size = 0x400, scoped, tag = 'output window, operand 2, single buffered']
    #allocation16 [shape = 'u8[512]{0}', space=vmem, size = 0x400, scoped, tag = 'output window, operand 3, single buffered']
    #allocation17 [shape = 's32[1]{0}', space=sflag, size = 0x4, scoped, tag = 'scoped memory for tpu_custom_call.1']
    %14 = vsyncpa [#allocation4], 0
    %15 = vsyncpa [#allocation7], 0
    %16 = vsyncpa [#allocation10], 0
    %17 = vsyncpa [#allocation5], 0
    %18 = vsyncpa [#allocation14], 0
    %19 = vsyncpa [#allocation17], 0
    // Predicated region
    $region2: #{tpu_custom_call.1} parent=1 // pred_check
      _
    $region3: #{tpu_custom_call.1} parent=1 // pred_check_branch
      %21 = sbr.rel (0) target = $region5
    $region4: #{tpu_custom_call.1} parent=1 // pred_region
      %s22 = sadd.s32 0, 0
      %s23 = smul.u32 6, %s22
      %s25 = ssub.s32 768, 768
      %26 = vsyncadd [#allocation4], %s25
      %s27 = smul.addr %s23, 128
      %s28 = scalar_lea.hbm %s0, %s27
      %s29 = sshll.u32 [#allocation3], 4
      %s30 = int_to_ptr.vmem [resolvable:$true] %s29
      %35 = dma.hbm_to_vmem [thread:$0]  %s28, 768, %s30, [#allocation4], 128, 128, 8
    $region5: #{tpu_custom_call.1} parent=1 // pred_fallthru
      _
    // Predicated region
    $region6: #{tpu_custom_call.1} parent=1 // pred_check
      _
    $region7: #{tpu_custom_call.1} parent=1 // pred_check_branch
      %37 = sbr.rel (0) target = $region9
    $region8: #{tpu_custom_call.1} parent=1 // pred_region
      %s38 = sadd.s32 0, 0
      %s39 = smul.u32 6, %s38
      %s41 = ssub.s32 768, 768
      %42 = vsyncadd [#allocation7], %s41
      %s43 = smul.addr %s39, 128
      %s44 = scalar_lea.hbm %s1, %s43
      %s45 = sshll.u32 [#allocation6], 4
      %s46 = int_to_ptr.vmem [resolvable:$true] %s45
      %51 = dma.hbm_to_vmem [thread:$0]  %s44, 768, %s46, [#allocation7], 128, 128, 8
    $region9: #{tpu_custom_call.1} parent=1 // pred_fallthru
      _
    // Predicated region
    $region10: #{tpu_custom_call.1} parent=1 // pred_check
      _
    $region11: #{tpu_custom_call.1} parent=1 // pred_check_branch
      %53 = sbr.rel (0) target = $region13
    $region12: #{tpu_custom_call.1} parent=1 // pred_region
      %s54 = sadd.s32 0, 0
      %s55 = smul.u32 6, %s54
      %s57 = ssub.s32 768, 768
      %58 = vsyncadd [#allocation7], %s57
      %s59 = smul.addr %s55, 128
      %s60 = scalar_lea.hbm %s2, %s59
      %s61 = sshll.u32 [#allocation8], 4
      %s62 = int_to_ptr.vmem [resolvable:$true] %s61
      %67 = dma.hbm_to_vmem [thread:$0]  %s60, 768, %s62, [#allocation7], 128, 128, 8
    $region13: #{tpu_custom_call.1} parent=1 // pred_fallthru
      _
    // Predicated region
    $region14: #{tpu_custom_call.1} parent=1 // pred_check
      _
    $region15: #{tpu_custom_call.1} parent=1 // pred_check_branch
      %69 = sbr.rel (0) target = $region17
    $region16: #{tpu_custom_call.1} parent=1 // pred_region
      %s70 = sadd.s32 0, 0
      %s71 = smul.u32 6, %s70
      %s73 = ssub.s32 768, 768
      %74 = vsyncadd [#allocation10], %s73
      %s75 = smul.addr %s71, 128
      %s76 = scalar_lea.hbm %s3, %s75
      %s77 = sshll.u32 [#allocation9], 4
      %s78 = int_to_ptr.vmem [resolvable:$true] %s77
      %83 = dma.hbm_to_vmem [thread:$0]  %s76, 768, %s78, [#allocation10], 128, 128, 8
    $region17: #{tpu_custom_call.1} parent=1 // pred_fallthru
      _
    // Predicated region
    $region18: #{tpu_custom_call.1} parent=1 // pred_check
      _
    $region19: #{tpu_custom_call.1} parent=1 // pred_check_branch
      %85 = sbr.rel (0) target = $region21
    $region20: #{tpu_custom_call.1} parent=1 // pred_region
      %s86 = sadd.s32 0, 0
      %s87 = smul.u32 6, %s86
      %s89 = ssub.s32 768, 768
      %90 = vsyncadd [#allocation10], %s89
      %s91 = smul.addr %s87, 128
      %s92 = scalar_lea.hbm %s4, %s91
      %s93 = sshll.u32 [#allocation11], 4
      %s94 = int_to_ptr.vmem [resolvable:$true] %s93
      %99 = dma.hbm_to_vmem [thread:$0]  %s92, 768, %s94, [#allocation10], 128, 128, 8
    $region21: #{tpu_custom_call.1} parent=1 // pred_fallthru
      _
    // Predicated region
    $region22: #{tpu_custom_call.1} parent=1 // pred_check
      _
    $region23: #{tpu_custom_call.1} parent=1 // pred_check_branch
      %101 = sbr.rel (0) target = $region25
    $region24: #{tpu_custom_call.1} parent=1 // pred_region
      %102 = dma.done [#allocation4], 768
    $region25: #{tpu_custom_call.1} parent=1 // pred_fallthru
      _
    // Predicated region
    $region26: #{tpu_custom_call.1} parent=1 // pred_check
      _
    $region27: #{tpu_custom_call.1} parent=1 // pred_check_branch
      %104 = sbr.rel (0) target = $region29
    $region28: #{tpu_custom_call.1} parent=1 // pred_region
      %105 = dma.done [#allocation7], 768
    $region29: #{tpu_custom_call.1} parent=1 // pred_fallthru
      _
    // Predicated region
    $region30: #{tpu_custom_call.1} parent=1 // pred_check
      _
    $region31: #{tpu_custom_call.1} parent=1 // pred_check_branch
      %107 = sbr.rel (0) target = $region33
    $region32: #{tpu_custom_call.1} parent=1 // pred_region
      %108 = dma.done [#allocation7], 768
    $region33: #{tpu_custom_call.1} parent=1 // pred_fallthru
      _
    // Predicated region
    $region34: #{tpu_custom_call.1} parent=1 // pred_check
      _
    $region35: #{tpu_custom_call.1} parent=1 // pred_check_branch
      %110 = sbr.rel (0) target = $region37
    $region36: #{tpu_custom_call.1} parent=1 // pred_region
      %111 = dma.done [#allocation10], 768
    $region37: #{tpu_custom_call.1} parent=1 // pred_fallthru
      _
    // Predicated region
    $region38: #{tpu_custom_call.1} parent=1 // pred_check
      _
    $region39: #{tpu_custom_call.1} parent=1 // pred_check_branch
      %113 = sbr.rel (0) target = $region41
    $region40: #{tpu_custom_call.1} parent=1 // pred_region
      %114 = dma.done [#allocation10], 768
    $region41: #{tpu_custom_call.1} parent=1 // pred_fallthru
      _
    %s115 = sadd.s32 0, 0
    %s116 = smul.u32 6, %s115
    %s117 = sadd.s32 0, 0
    %s118 = smul.u32 6, %s117
    %s119 = sadd.s32 0, 0
    %s120 = smul.u32 6, %s119
    %s121 = sadd.s32 0, 0
    %s122 = smul.u32 6, %s121
    %s123 = sadd.s32 0, 0
    %s124 = smul.u32 6, %s123
    %p125 = scmp.eq.s32.totalorder 0, 0
    // Predicated region
    $region42: #{tpu_custom_call.1} parent=1 // pred_check
      %p126 = pneg %p125
    $region43: #{tpu_custom_call.1} parent=1 // pred_check_branch
      %128 = sbr.rel (%p126) target = $region45
    $region44: #{tpu_custom_call.1} parent=1 // pred_region
      %129 = vst [vmem:[#allocation2] sm:$0xff] 0.0
      %130 = vst [vmem:[#allocation2 + $0x8] sm:$0xff] 0.0
      %131 = vst [vmem:[#allocation2 + $0x10] sm:$0xff] 0.0
      %132 = vst [vmem:[#allocation2 + $0x18] sm:$0xff] 0.0
      %133 = vst [vmem:[#allocation2 + $0x20] sm:$0xff] 0.0
      %134 = vst [vmem:[#allocation2 + $0x28] sm:$0xff] 0.0
      %135 = vst [vmem:[#allocation2 + $0x30] sm:$0xff] 0.0
      %136 = vst [vmem:[#allocation2 + $0x38] sm:$0xff] 0.0
      %137 = vst [vmem:[#allocation2 + $0x40] sm:$0xff] 0.0
      %138 = vst [vmem:[#allocation2 + $0x48] sm:$0xff] 0.0
      %139 = vst [vmem:[#allocation2 + $0x50] sm:$0xff] 0.0
      %140 = vst [vmem:[#allocation2 + $0x58] sm:$0xff] 0.0
      %141 = vst [vmem:[#allocation2 + $0x60] sm:$0xff] 0.0
      %142 = vst [vmem:[#allocation2 + $0x68] sm:$0xff] 0.0
      %143 = vst [vmem:[#allocation2 + $0x70] sm:$0xff] 0.0
      %144 = vst [vmem:[#allocation2 + $0x78] sm:$0xff] 0.0
      %145 = vst [vmem:[#allocation2 + $0x80] sm:$0xff] 0.0
      %146 = vst [vmem:[#allocation2 + $0x88] sm:$0xff] 0.0
      %147 = vst [vmem:[#allocation2 + $0x90] sm:$0xff] 0.0
      %148 = vst [vmem:[#allocation2 + $0x98] sm:$0xff] 0.0
      %149 = vst [vmem:[#allocation2 + $0xa0] sm:$0xff] 0.0
      %150 = vst [vmem:[#allocation2 + $0xa8] sm:$0xff] 0.0
      %151 = vst [vmem:[#allocation2 + $0xb0] sm:$0xff] 0.0
      %152 = vst [vmem:[#allocation2 + $0xb8] sm:$0xff] 0.0
    $region45: #{tpu_custom_call.1} parent=1 // pred_fallthru
      _
    %v153 = vld [vmem:[#allocation3] sm:$0xff]
    %v154 = vld [vmem:[#allocation3 + $0x8] sm:$0xff]
    %v155 = vld [vmem:[#allocation3 + $0x10] sm:$0xff]
    %v156 = vld [vmem:[#allocation3 + $0x18] sm:$0xff]
    %v157 = vld [vmem:[#allocation3 + $0x20] sm:$0xff]
    %v158 = vld [vmem:[#allocation3 + $0x28] sm:$0xff]
    %v159 = vld [vmem:[#allocation6] sm:$0xff]
    %v160 = vld [vmem:[#allocation6 + $0x8] sm:$0xff]
    %v161 = vld [vmem:[#allocation6 + $0x10] sm:$0xff]
    %v162 = vld [vmem:[#allocation6 + $0x18] sm:$0xff]
    %v163 = vld [vmem:[#allocation6 + $0x20] sm:$0xff]
    %v164 = vld [vmem:[#allocation6 + $0x28] sm:$0xff]
    %v165 = vsub.f32 %v159, %v153
    %v166 = vsub.f32 %v160, %v154
    %v167 = vsub.f32 %v161, %v155
    %v168 = vsub.f32 %v162, %v156
    %v169 = vsub.f32 %v163, %v157
    %v170 = vsub.f32 %v164, %v158
    %v171 = vmul.f32 %v165, %v165
    %v172 = vmul.f32 %v166, %v166
    %v173 = vmul.f32 %v167, %v167
    %v174 = vmul.f32 %v168, %v168
    %v175 = vmul.f32 %v169, %v169
    %v176 = vmul.f32 %v170, %v170
    %v177 = vld [vmem:[#allocation2] sm:$0xff]
    %v178 = vld [vmem:[#allocation2 + $0x8] sm:$0xff]
    %v179 = vld [vmem:[#allocation2 + $0x10] sm:$0xff]
    %v180 = vld [vmem:[#allocation2 + $0x18] sm:$0xff]
    %v181 = vld [vmem:[#allocation2 + $0x20] sm:$0xff]
    %v182 = vld [vmem:[#allocation2 + $0x28] sm:$0xff]
    %v183 = vadd.f32 %v177, %v171
    %v184 = vadd.f32 %v178, %v172
    %v185 = vadd.f32 %v179, %v173
    %v186 = vadd.f32 %v180, %v174
    %v187 = vadd.f32 %v181, %v175
    %v188 = vadd.f32 %v182, %v176
    %189 = vst [vmem:[#allocation2] sm:$0xff] %v183
    %190 = vst [vmem:[#allocation2 + $0x8] sm:$0xff] %v184
    %191 = vst [vmem:[#allocation2 + $0x10] sm:$0xff] %v185
    %192 = vst [vmem:[#allocation2 + $0x18] sm:$0xff] %v186
    %193 = vst [vmem:[#allocation2 + $0x20] sm:$0xff] %v187
    %194 = vst [vmem:[#allocation2 + $0x28] sm:$0xff] %v188
    %v195 = vld [vmem:[#allocation8] sm:$0xff]
    %v196 = vld [vmem:[#allocation8 + $0x8] sm:$0xff]
    %v197 = vld [vmem:[#allocation8 + $0x10] sm:$0xff]
    %v198 = vld [vmem:[#allocation8 + $0x18] sm:$0xff]
    %v199 = vld [vmem:[#allocation8 + $0x20] sm:$0xff]
    %v200 = vld [vmem:[#allocation8 + $0x28] sm:$0xff]
    %v201 = vsub.f32 %v195, %v153
    %v202 = vsub.f32 %v196, %v154
    %v203 = vsub.f32 %v197, %v155
    %v204 = vsub.f32 %v198, %v156
    %v205 = vsub.f32 %v199, %v157
    %v206 = vsub.f32 %v200, %v158
    %v207 = vmul.f32 %v201, %v201
    %v208 = vmul.f32 %v202, %v202
    %v209 = vmul.f32 %v203, %v203
    %v210 = vmul.f32 %v204, %v204
    %v211 = vmul.f32 %v205, %v205
    %v212 = vmul.f32 %v206, %v206
    %s213 = scalar_lea.vmem [#allocation2], 48
    %v214 = vld [vmem:[%s213] sm:$0xff]
    %v215 = vld [vmem:[%s213 + $0x8] sm:$0xff]
    %v216 = vld [vmem:[%s213 + $0x10] sm:$0xff]
    %v217 = vld [vmem:[%s213 + $0x18] sm:$0xff]
    %v218 = vld [vmem:[%s213 + $0x20] sm:$0xff]
    %v219 = vld [vmem:[%s213 + $0x28] sm:$0xff]
    %v220 = vadd.f32 %v214, %v207
    %v221 = vadd.f32 %v215, %v208
    %v222 = vadd.f32 %v216, %v209
    %v223 = vadd.f32 %v217, %v210
    %v224 = vadd.f32 %v218, %v211
    %v225 = vadd.f32 %v219, %v212
    %226 = vst [vmem:[%s213] sm:$0xff] %v220
    %227 = vst [vmem:[%s213 + $0x8] sm:$0xff] %v221
    %228 = vst [vmem:[%s213 + $0x10] sm:$0xff] %v222
    %229 = vst [vmem:[%s213 + $0x18] sm:$0xff] %v223
    %230 = vst [vmem:[%s213 + $0x20] sm:$0xff] %v224
    %231 = vst [vmem:[%s213 + $0x28] sm:$0xff] %v225
    %v232 = vld [vmem:[#allocation9] sm:$0xff]
    %v233 = vld [vmem:[#allocation9 + $0x8] sm:$0xff]
    %v234 = vld [vmem:[#allocation9 + $0x10] sm:$0xff]
    %v235 = vld [vmem:[#allocation9 + $0x18] sm:$0xff]
    %v236 = vld [vmem:[#allocation9 + $0x20] sm:$0xff]
    %v237 = vld [vmem:[#allocation9 + $0x28] sm:$0xff]
    %v238 = vsub.f32 %v232, %v153
    %v239 = vsub.f32 %v233, %v154
    %v240 = vsub.f32 %v234, %v155
    %v241 = vsub.f32 %v235, %v156
    %v242 = vsub.f32 %v236, %v157
    %v243 = vsub.f32 %v237, %v158
    %v244 = vmul.f32 %v238, %v238
    %v245 = vmul.f32 %v239, %v239
    %v246 = vmul.f32 %v240, %v240
    %v247 = vmul.f32 %v241, %v241
    %v248 = vmul.f32 %v242, %v242
    %v249 = vmul.f32 %v243, %v243
    %s250 = scalar_lea.vmem [#allocation2], 96
    %v251 = vld [vmem:[%s250] sm:$0xff]
    %v252 = vld [vmem:[%s250 + $0x8] sm:$0xff]
    %v253 = vld [vmem:[%s250 + $0x10] sm:$0xff]
    %v254 = vld [vmem:[%s250 + $0x18] sm:$0xff]
    %v255 = vld [vmem:[%s250 + $0x20] sm:$0xff]
    %v256 = vld [vmem:[%s250 + $0x28] sm:$0xff]
    %v257 = vadd.f32 %v251, %v244
    %v258 = vadd.f32 %v252, %v245
    %v259 = vadd.f32 %v253, %v246
    %v260 = vadd.f32 %v254, %v247
    %v261 = vadd.f32 %v255, %v248
    %v262 = vadd.f32 %v256, %v249
    %263 = vst [vmem:[%s250] sm:$0xff] %v257
    %264 = vst [vmem:[%s250 + $0x8] sm:$0xff] %v258
    %265 = vst [vmem:[%s250 + $0x10] sm:$0xff] %v259
    %266 = vst [vmem:[%s250 + $0x18] sm:$0xff] %v260
    %267 = vst [vmem:[%s250 + $0x20] sm:$0xff] %v261
    %268 = vst [vmem:[%s250 + $0x28] sm:$0xff] %v262
    %v269 = vld [vmem:[#allocation11] sm:$0xff]
    %v270 = vld [vmem:[#allocation11 + $0x8] sm:$0xff]
    %v271 = vld [vmem:[#allocation11 + $0x10] sm:$0xff]
    %v272 = vld [vmem:[#allocation11 + $0x18] sm:$0xff]
    %v273 = vld [vmem:[#allocation11 + $0x20] sm:$0xff]
    %v274 = vld [vmem:[#allocation11 + $0x28] sm:$0xff]
    %v275 = vsub.f32 %v269, %v153
    %v276 = vsub.f32 %v270, %v154
    %v277 = vsub.f32 %v271, %v155
    %v278 = vsub.f32 %v272, %v156
    %v279 = vsub.f32 %v273, %v157
    %v280 = vsub.f32 %v274, %v158
    %v281 = vmul.f32 %v275, %v275
    %v282 = vmul.f32 %v276, %v276
    %v283 = vmul.f32 %v277, %v277
    %v284 = vmul.f32 %v278, %v278
    %v285 = vmul.f32 %v279, %v279
    %v286 = vmul.f32 %v280, %v280
    %s287 = scalar_lea.vmem [#allocation2], 144
    %v288 = vld [vmem:[%s287] sm:$0xff]
    %v289 = vld [vmem:[%s287 + $0x8] sm:$0xff]
    %v290 = vld [vmem:[%s287 + $0x10] sm:$0xff]
    %v291 = vld [vmem:[%s287 + $0x18] sm:$0xff]
    %v292 = vld [vmem:[%s287 + $0x20] sm:$0xff]
    %v293 = vld [vmem:[%s287 + $0x28] sm:$0xff]
    %v294 = vadd.f32 %v288, %v281
    %v295 = vadd.f32 %v289, %v282
    %v296 = vadd.f32 %v290, %v283
    %v297 = vadd.f32 %v291, %v284
    %v298 = vadd.f32 %v292, %v285
    %v299 = vadd.f32 %v293, %v286
    %300 = vst [vmem:[%s287] sm:$0xff] %v294
    %301 = vst [vmem:[%s287 + $0x8] sm:$0xff] %v295
    %302 = vst [vmem:[%s287 + $0x10] sm:$0xff] %v296
    %303 = vst [vmem:[%s287 + $0x18] sm:$0xff] %v297
    %304 = vst [vmem:[%s287 + $0x20] sm:$0xff] %v298
    %305 = vst [vmem:[%s287 + $0x28] sm:$0xff] %v299
    // Predicated region
    $region46: #{tpu_custom_call.1} parent=1 // pred_check
      %p306 = pneg %p125
    $region47: #{tpu_custom_call.1} parent=1 // pred_check_branch
      %308 = sbr.rel (%p306) target = $region49
    $region48: #{tpu_custom_call.1} parent=1 // pred_region
      %v309 = vld [vmem:[#allocation2] sm:$0xff]
      %v310 = vld [vmem:[#allocation2 + $0x8] sm:$0xff]
      %v311 = vld [vmem:[#allocation2 + $0x10] sm:$0xff]
      %v312 = vld [vmem:[#allocation2 + $0x18] sm:$0xff]
      %v313 = vld [vmem:[#allocation2 + $0x20] sm:$0xff]
      %v314 = vld [vmem:[#allocation2 + $0x28] sm:$0xff]
      %v315 = vadd.f32 %v309, %v310
      %v316 = vadd.f32 %v315, %v311
      %v317 = vadd.f32 %v316, %v312
      %v318 = vadd.f32 %v317, %v313
      %v319 = vadd.f32 %v318, %v314
      %320 = vadd.xlane.f32.xlu0 %v319
      %v321 = vpop.xlane.xlu0 %320
      %v322 = vrot.slane %v321, 4
      %v323 = vadd.f32 %v321, %v322
      %v324 = vrot.slane %v323, 2
      %v325 = vadd.f32 %v323, %v324
      %v326 = vrot.slane %v325, 1
      %v327 = vadd.f32 %v325, %v326
      %s328 = vtos %v327
      %v329 = vstv %s328
      %vm330 = vcmask 0
      %331 = vst.msk [vmem:[#allocation12] sm:$0x1] %vm330, %v329
      %v332 = vld [vmem:[%s213] sm:$0xff]
      %v333 = vld [vmem:[%s213 + $0x8] sm:$0xff]
      %v334 = vld [vmem:[%s213 + $0x10] sm:$0xff]
      %v335 = vld [vmem:[%s213 + $0x18] sm:$0xff]
      %v336 = vld [vmem:[%s213 + $0x20] sm:$0xff]
      %v337 = vld [vmem:[%s213 + $0x28] sm:$0xff]
      %v338 = vadd.f32 %v332, %v333
      %v339 = vadd.f32 %v338, %v334
      %v340 = vadd.f32 %v339, %v335
      %v341 = vadd.f32 %v340, %v336
      %v342 = vadd.f32 %v341, %v337
      %343 = vadd.xlane.f32.xlu0 %v342
      %v344 = vpop.xlane.xlu0 %343
      %v345 = vrot.slane %v344, 4
      %v346 = vadd.f32 %v344, %v345
      %v347 = vrot.slane %v346, 2
      %v348 = vadd.f32 %v346, %v347
      %v349 = vrot.slane %v348, 1
      %v350 = vadd.f32 %v348, %v349
      %s351 = vtos %v350
      %v352 = vstv %s351
      %353 = vst.msk [vmem:[#allocation13] sm:$0x1] %vm330, %v352
      %v354 = vld [vmem:[%s250] sm:$0xff]
      %v355 = vld [vmem:[%s250 + $0x8] sm:$0xff]
      %v356 = vld [vmem:[%s250 + $0x10] sm:$0xff]
      %v357 = vld [vmem:[%s250 + $0x18] sm:$0xff]
      %v358 = vld [vmem:[%s250 + $0x20] sm:$0xff]
      %v359 = vld [vmem:[%s250 + $0x28] sm:$0xff]
      %v360 = vadd.f32 %v354, %v355
      %v361 = vadd.f32 %v360, %v356
      %v362 = vadd.f32 %v361, %v357
      %v363 = vadd.f32 %v362, %v358
      %v364 = vadd.f32 %v363, %v359
      %365 = vadd.xlane.f32.xlu0 %v364
      %v366 = vpop.xlane.xlu0 %365
      %v367 = vrot.slane %v366, 4
      %v368 = vadd.f32 %v366, %v367
      %v369 = vrot.slane %v368, 2
      %v370 = vadd.f32 %v368, %v369
      %v371 = vrot.slane %v370, 1
      %v372 = vadd.f32 %v370, %v371
      %s373 = vtos %v372
      %v374 = vstv %s373
      %375 = vst.msk [vmem:[#allocation15] sm:$0x1] %vm330, %v374
      %v376 = vld [vmem:[%s287] sm:$0xff]
      %v377 = vld [vmem:[%s287 + $0x8] sm:$0xff]
      %v378 = vld [vmem:[%s287 + $0x10] sm:$0xff]
      %v379 = vld [vmem:[%s287 + $0x18] sm:$0xff]
      %v380 = vld [vmem:[%s287 + $0x20] sm:$0xff]
      %v381 = vld [vmem:[%s287 + $0x28] sm:$0xff]
      %v382 = vadd.f32 %v376, %v377
      %v383 = vadd.f32 %v382, %v378
      %v384 = vadd.f32 %v383, %v379
      %v385 = vadd.f32 %v384, %v380
      %v386 = vadd.f32 %v385, %v381
      %387 = vadd.xlane.f32.xlu0 %v386
      %v388 = vpop.xlane.xlu0 %387
      %v389 = vrot.slane %v388, 4
      %v390 = vadd.f32 %v388, %v389
      %v391 = vrot.slane %v390, 2
      %v392 = vadd.f32 %v390, %v391
      %v393 = vrot.slane %v392, 1
      %v394 = vadd.f32 %v392, %v393
      %s395 = vtos %v394
      %v396 = vstv %s395
      %397 = vst.msk [vmem:[#allocation16] sm:$0x1] %vm330, %v396
    $region49: #{tpu_custom_call.1} parent=1 // pred_fallthru
      _
    // Predicated region
    $region50: #{tpu_custom_call.1} parent=1 // pred_check
      _
    $region51: #{tpu_custom_call.1} parent=1 // pred_check_branch
      %399 = sbr.rel (0) target = $region53
    $region52: #{tpu_custom_call.1} parent=1 // pred_region
      %s401 = ssub.s32 16, 16
      %402 = vsyncadd [#allocation5], %s401
      %s404 = sshll.u32 [#allocation12], 4
      %s405 = int_to_ptr.vmem [resolvable:$true] %s404
      %407 = dma.vmem_to_hbm [thread:$0]  %s405, 16, %s5, [#allocation5]
    $region53: #{tpu_custom_call.1} parent=1 // pred_fallthru
      _
    // Predicated region
    $region54: #{tpu_custom_call.1} parent=1 // pred_check
      _
    $region55: #{tpu_custom_call.1} parent=1 // pred_check_branch
      %409 = sbr.rel (0) target = $region57
    $region56: #{tpu_custom_call.1} parent=1 // pred_region
      %s411 = ssub.s32 16, 16
      %412 = vsyncadd [#allocation14], %s411
      %s414 = sshll.u32 [#allocation13], 4
      %s415 = int_to_ptr.vmem [resolvable:$true] %s414
      %417 = dma.vmem_to_hbm [thread:$0]  %s415, 16, %s6, [#allocation14]
    $region57: #{tpu_custom_call.1} parent=1 // pred_fallthru
      _
    // Predicated region
    $region58: #{tpu_custom_call.1} parent=1 // pred_check
      _
    $region59: #{tpu_custom_call.1} parent=1 // pred_check_branch
      %419 = sbr.rel (0) target = $region61
    $region60: #{tpu_custom_call.1} parent=1 // pred_region
      %s421 = ssub.s32 16, 16
      %422 = vsyncadd [#allocation14], %s421
      %s424 = sshll.u32 [#allocation15], 4
      %s425 = int_to_ptr.vmem [resolvable:$true] %s424
      %427 = dma.vmem_to_hbm [thread:$0]  %s425, 16, %s7, [#allocation14]
    $region61: #{tpu_custom_call.1} parent=1 // pred_fallthru
      _
    // Predicated region
    $region62: #{tpu_custom_call.1} parent=1 // pred_check
      _
    $region63: #{tpu_custom_call.1} parent=1 // pred_check_branch
      %429 = sbr.rel (0) target = $region65
    $region64: #{tpu_custom_call.1} parent=1 // pred_region
      %s431 = ssub.s32 16, 16
      %432 = vsyncadd [#allocation17], %s431
      %s434 = sshll.u32 [#allocation16], 4
      %s435 = int_to_ptr.vmem [resolvable:$true] %s434
      %437 = dma.vmem_to_hbm [thread:$0]  %s435, 16, %s8, [#allocation17]
    $region65: #{tpu_custom_call.1} parent=1 // pred_fallthru
      _
    // Predicated region
    $region66: #{tpu_custom_call.1} parent=1 // pred_check
      _
    $region67: #{tpu_custom_call.1} parent=1 // pred_check_branch
      %439 = sbr.rel (0) target = $region69
    $region68: #{tpu_custom_call.1} parent=1 // pred_region
      %440 = dma.done [#allocation5], 16
    $region69: #{tpu_custom_call.1} parent=1 // pred_fallthru
      _
    // Predicated region
    $region70: #{tpu_custom_call.1} parent=1 // pred_check
      _
    $region71: #{tpu_custom_call.1} parent=1 // pred_check_branch
      %442 = sbr.rel (0) target = $region73
    $region72: #{tpu_custom_call.1} parent=1 // pred_region
      %443 = dma.done [#allocation14], 16
    $region73: #{tpu_custom_call.1} parent=1 // pred_fallthru
      _
    // Predicated region
    $region74: #{tpu_custom_call.1} parent=1 // pred_check
      _
    $region75: #{tpu_custom_call.1} parent=1 // pred_check_branch
      %445 = sbr.rel (0) target = $region77
    $region76: #{tpu_custom_call.1} parent=1 // pred_region
      %446 = dma.done [#allocation14], 16
    $region77: #{tpu_custom_call.1} parent=1 // pred_fallthru
      _
    // Predicated region
    $region78: #{tpu_custom_call.1} parent=1 // pred_check
      _
    $region79: #{tpu_custom_call.1} parent=1 // pred_check_branch
      %448 = sbr.rel (0) target = $region81
    $region80: #{tpu_custom_call.1} parent=1 // pred_region
      %449 = dma.done [#allocation17], 16
    $region81: #{tpu_custom_call.1} parent=1 // pred_fallthru
      _
    %450 = vsyncpa [#allocation4], 1
    %451 = vsyncpa [#allocation7], 1
    %452 = vsyncpa [#allocation10], 1
    %453 = vsyncpa [#allocation5], 1
    %454 = vsyncpa [#allocation14], 1
    %455 = vsyncpa [#allocation17], 1

</llo_original>
